<compile_context>
chip_gen: v7x
topology: tpu7x:2x2x1
jax: 0.10.0
libtpu: 0.0.40
codegen_flags: <defaults>
</compile_context>

<pallas_src>
import jax
import jax.numpy as jnp
from jax.experimental import pallas as pl
from jax.experimental.pallas import tpu as pltpu

LANES = 128     # lane width: last-dim padding target
SUBLANES = 8    # f32 sublane count: batch-tile granularity


def _round_up(n, m):
    return (n + m - 1) // m * m


def qnetwork_kernel(x_ref, w1_ref, b1_ref, w2_ref, b2_ref, w3_ref, b3_ref, out_ref):
    # bf16 MXU operands, f32 accumulation; bias-add / ReLU in f32 on the VPU.
    x = x_ref[...].astype(jnp.bfloat16)
    h = jnp.dot(x, w1_ref[...], preferred_element_type=jnp.float32)
    h = jnp.maximum(h + b1_ref[...], 0.0)
    h = jnp.dot(h.astype(jnp.bfloat16), w2_ref[...], preferred_element_type=jnp.float32)
    h = jnp.maximum(h + b2_ref[...], 0.0)
    o = jnp.dot(h.astype(jnp.bfloat16), w3_ref[...], preferred_element_type=jnp.float32)
    out_ref[...] = (o + b3_ref[...]).astype(out_ref.dtype)


def prepare_params(params, weight_dtype=jnp.bfloat16):
    """Zero-pad hidden/output feature dims up to multiples of 128 lanes and cast the
    MXU weight operands to bf16 (biases stay f32)."""
    w1, b1 = params["w1"], params["b1"]
    w2, b2 = params["w2"], params["b2"]
    w3, b3 = params["w3"], params["b3"]
    in_dim, h1 = w1.shape
    h2, out_dim = w3.shape
    hp1 = _round_up(h1, LANES)
    hp2 = _round_up(h2, LANES)
    op = _round_up(out_dim, LANES)

    def pad2(a, rows, cols):
        return jnp.pad(a, ((0, rows - a.shape[0]), (0, cols - a.shape[1])))

    return dict(
        w1=pad2(w1, in_dim, hp1).astype(weight_dtype),
        b1=pad2(b1, 1, hp1).astype(jnp.float32),
        w2=pad2(w2, hp1, hp2).astype(weight_dtype),
        b2=pad2(b2, 1, hp2).astype(jnp.float32),
        w3=pad2(w3, hp2, op).astype(weight_dtype),
        b3=pad2(b3, 1, op).astype(jnp.float32),
        out_dim=out_dim,
    )


def qnetwork_forward(x, prepped, *, tile_b=512):
    """x: (B, input_dim) f32. prepped: output of prepare_params. Returns (B, out_dim) f32."""
    B, in_dim = x.shape
    out_pad = prepped["b3"].shape[1]
    out_dim = prepped["out_dim"]

    # Batch tiling: TB is a multiple of 8 (f32 sublane); pad B so the grid divides exactly.
    b8 = _round_up(B, SUBLANES)
    tb = min(_round_up(tile_b, SUBLANES), b8)
    b_pad = _round_up(b8, tb)
    if b_pad != B:
        x = jnp.pad(x, ((0, b_pad - B), (0, 0)))
    grid = (b_pad // tb,)

    w1, b1 = prepped["w1"], prepped["b1"]
    w2, b2 = prepped["w2"], prepped["b2"]
    w3, b3 = prepped["w3"], prepped["b3"]

    def resident(a):
        # Same block index every grid step -> weights/biases stay pinned in VMEM.
        return pl.BlockSpec(a.shape, lambda i: (0, 0))

    out = pl.pallas_call(
        qnetwork_kernel,
        out_shape=jax.ShapeDtypeStruct((b_pad, out_pad), jnp.float32),
        grid=grid,
        in_specs=[
            pl.BlockSpec((tb, in_dim), lambda i: (i, 0)),   # x: tiled over batch
            resident(w1), resident(b1),
            resident(w2), resident(b2),
            resident(w3), resident(b3),
        ],
        out_specs=pl.BlockSpec((tb, out_pad), lambda i: (i, 0)),
        compiler_params=pltpu.CompilerParams(
            dimension_semantics=("parallel",),  # v7x: shard batch tiles across both TCs
        ),
    )(x, w1, b1, w2, b2, w3, b3)

    return out[:B, :out_dim]


def init_params(key, input_dim, output_dim, hidden=64):
    """Deterministic init matching PyTorch nn.Linear default (uniform +-1/sqrt(fan_in)).
    Weights stored transposed vs PyTorch: (in_features, out_features)."""
    ks = jax.random.split(key, 6)

    def linear(kw, kb, fan_in, fan_out):
        bound = 1.0 / jnp.sqrt(fan_in)
        w = jax.random.uniform(kw, (fan_in, fan_out), jnp.float32, -bound, bound)
        b = jax.random.uniform(kb, (1, fan_out), jnp.float32, -bound, bound)
        return w, b

    w1, b1 = linear(ks[0], ks[1], input_dim, hidden)
    w2, b2 = linear(ks[2], ks[3], hidden, hidden)
    w3, b3 = linear(ks[4], ks[5], hidden, output_dim)
    return dict(w1=w1, b1=b1, w2=w2, b2=b2, w3=w3, b3=b3)


if __name__ == "__main__":
    key = jax.random.PRNGKey(0)
    k_x, k_p = jax.random.split(key)

    batch, input_dim, output_dim = 32, 16, 4   # snake state vector -> 4 actions
    x = jax.random.normal(k_x, (batch, input_dim), jnp.float32)
    params = init_params(k_p, input_dim, output_dim)
    prepped = prepare_params(params)

    # Small tile_b just to exercise a multi-step batch grid at this toy size;
    # for real RL eval/training batches use the default tile_b=512.
    out = qnetwork_forward(x, prepped, tile_b=8)
    out = jax.block_until_ready(out)
    assert out.shape == (batch, output_dim)

    # Reference mirroring the kernel's bf16-operand / f32-accumulate math.
    w1b = params["w1"].astype(jnp.bfloat16)
    w2b = params["w2"].astype(jnp.bfloat16)
    w3b = params["w3"].astype(jnp.bfloat16)
    h = jnp.dot(x.astype(jnp.bfloat16), w1b, preferred_element_type=jnp.float32)
    h = jnp.maximum(h + params["b1"], 0.0)
    h = jnp.dot(h.astype(jnp.bfloat16), w2b, preferred_element_type=jnp.float32)
    h = jnp.maximum(h + params["b2"], 0.0)
    ref = jnp.dot(h.astype(jnp.bfloat16), w3b, preferred_element_type=jnp.float32) + params["b3"]
    assert jnp.allclose(out, ref, atol=1e-2, rtol=1e-2), "mismatch vs bf16 reference"

    # Looser sanity check against the pure-f32 reference (bf16 MXU operands ~ f32).
    hf = jnp.maximum(x @ params["w1"] + params["b1"], 0.0)
    hf = jnp.maximum(hf @ params["w2"] + params["b2"], 0.0)
    reff = hf @ params["w3"] + params["b3"]
    assert jnp.allclose(out, reff, atol=5e-2, rtol=5e-2), "mismatch vs f32 reference"

    print("KERNEL_OK")
</pallas_src>

<mosaic_0001>
module attributes {stable_mosaic.version = 11 : i64} {
  func.func @qnetwork_kernel(%arg0: i32, %arg1: memref<8x16xf32, #tpu.memory_space<vmem>>, %arg2: memref<16x128xbf16, #tpu.memory_space<vmem>>, %arg3: memref<1x128xf32, #tpu.memory_space<vmem>>, %arg4: memref<128x128xbf16, #tpu.memory_space<vmem>>, %arg5: memref<1x128xf32, #tpu.memory_space<vmem>>, %arg6: memref<128x128xbf16, #tpu.memory_space<vmem>>, %arg7: memref<1x128xf32, #tpu.memory_space<vmem>>, %arg8: memref<8x128xf32, #tpu.memory_space<vmem>>) attributes {dimension_semantics = [#tpu.dimension_semantics<parallel>], iteration_bounds = array<i64: 4>, scalar_prefetch = 0 : i64, scratch_operands = 0 : i64, tpu.core_type = #tpu.core_type<tc>, window_params = [{transform_indices = @transform_0, window_bounds = array<i64: 8, 16>}, {pipeline_mode = #tpu.pipeline_mode<synchronous>, transform_indices = @transform_1, window_bounds = array<i64: 16, 128>}, {pipeline_mode = #tpu.pipeline_mode<synchronous>, transform_indices = @transform_2, window_bounds = array<i64: 1, 128>}, {pipeline_mode = #tpu.pipeline_mode<synchronous>, transform_indices = @transform_3, window_bounds = array<i64: 128, 128>}, {pipeline_mode = #tpu.pipeline_mode<synchronous>, transform_indices = @transform_4, window_bounds = array<i64: 1, 128>}, {pipeline_mode = #tpu.pipeline_mode<synchronous>, transform_indices = @transform_5, window_bounds = array<i64: 128, 128>}, {pipeline_mode = #tpu.pipeline_mode<synchronous>, transform_indices = @transform_6, window_bounds = array<i64: 1, 128>}, {transform_indices = @transform_7, window_bounds = array<i64: 8, 128>}]} {
    %c0 = arith.constant 0 : index
    %c0_0 = arith.constant 0 : index
    %0 = vector.load %arg1[%c0, %c0_0] : memref<8x16xf32, #tpu.memory_space<vmem>>, vector<8x16xf32>
    %1 = arith.truncf %0 : vector<8x16xf32> to vector<8x16xbf16>
    %c0_1 = arith.constant 0 : index
    %c0_2 = arith.constant 0 : index
    %2 = vector.load %arg2[%c0_1, %c0_2] : memref<16x128xbf16, #tpu.memory_space<vmem>>, vector<16x128xbf16>
    %cst = arith.constant dense<0.000000e+00> : vector<8x128xf32>
    %3 = tpu.matmul %1, %2, %cst {dimension_numbers = #tpu.dot_dimension_numbers<[1], [0], [0], [1], [0, 0, 1, 1], [], []>} : vector<8x16xbf16>, vector<16x128xbf16>, vector<8x128xf32> -> vector<8x128xf32>
    %c0_3 = arith.constant 0 : index
    %c0_4 = arith.constant 0 : index
    %4 = vector.load %arg3[%c0_3, %c0_4] : memref<1x128xf32, #tpu.memory_space<vmem>>, vector<1x128xf32>
    %5 = vector.broadcast %4 : vector<1x128xf32> to vector<8x128xf32>
    %6 = arith.addf %3, %5 : vector<8x128xf32>
    %cst_5 = arith.constant 0.000000e+00 : f32
    %7 = vector.broadcast %cst_5 : f32 to vector<8x128xf32>
    %8 = arith.maximumf %6, %7 : vector<8x128xf32>
    %9 = arith.truncf %8 : vector<8x128xf32> to vector<8x128xbf16>
    %c0_6 = arith.constant 0 : index
    %c0_7 = arith.constant 0 : index
    %10 = vector.load %arg4[%c0_6, %c0_7] : memref<128x128xbf16, #tpu.memory_space<vmem>>, vector<128x128xbf16>
    %cst_8 = arith.constant dense<0.000000e+00> : vector<8x128xf32>
    %11 = tpu.matmul %9, %10, %cst_8 {dimension_numbers = #tpu.dot_dimension_numbers<[1], [0], [0], [1], [0, 0, 1, 1], [], []>} : vector<8x128xbf16>, vector<128x128xbf16>, vector<8x128xf32> -> vector<8x128xf32>
    %c0_9 = arith.constant 0 : index
    %c0_10 = arith.constant 0 : index
    %12 = vector.load %arg5[%c0_9, %c0_10] : memref<1x128xf32, #tpu.memory_space<vmem>>, vector<1x128xf32>
    %13 = vector.broadcast %12 : vector<1x128xf32> to vector<8x128xf32>
    %14 = arith.addf %11, %13 : vector<8x128xf32>
    %cst_11 = arith.constant 0.000000e+00 : f32
    %15 = vector.broadcast %cst_11 : f32 to vector<8x128xf32>
    %16 = arith.maximumf %14, %15 : vector<8x128xf32>
    %17 = arith.truncf %16 : vector<8x128xf32> to vector<8x128xbf16>
    %c0_12 = arith.constant 0 : index
    %c0_13 = arith.constant 0 : index
    %18 = vector.load %arg6[%c0_12, %c0_13] : memref<128x128xbf16, #tpu.memory_space<vmem>>, vector<128x128xbf16>
    %cst_14 = arith.constant dense<0.000000e+00> : vector<8x128xf32>
    %19 = tpu.matmul %17, %18, %cst_14 {dimension_numbers = #tpu.dot_dimension_numbers<[1], [0], [0], [1], [0, 0, 1, 1], [], []>} : vector<8x128xbf16>, vector<128x128xbf16>, vector<8x128xf32> -> vector<8x128xf32>
    %c0_15 = arith.constant 0 : index
    %c0_16 = arith.constant 0 : index
    %20 = vector.load %arg7[%c0_15, %c0_16] : memref<1x128xf32, #tpu.memory_space<vmem>>, vector<1x128xf32>
    %21 = vector.broadcast %20 : vector<1x128xf32> to vector<8x128xf32>
    %22 = arith.addf %19, %21 : vector<8x128xf32>
    %c0_17 = arith.constant 0 : index
    %c0_18 = arith.constant 0 : index
    %23 = vector.load %arg8[%c0_17, %c0_18] : memref<8x128xf32, #tpu.memory_space<vmem>>, vector<8x128xf32>
    tpu.vector_store %arg8[%c0_17, %c0_18], %22 {strides = array<i32>} : memref<8x128xf32, #tpu.memory_space<vmem>>, vector<8x128xf32>,
    return
  }
  func.func @transform_0(%arg0: i32) -> (i32, i32) {
    %c0_i32 = arith.constant 0 : i32
    %c0_i32_0 = arith.constant 0 : i32
    return %arg0, %c0_i32 : i32, i32
  }
  func.func @transform_1(%arg0: i32) -> (i32, i32) {
    %c0_i32 = arith.constant 0 : i32
    %c0_i32_0 = arith.constant 0 : i32
    %c0_i32_1 = arith.constant 0 : i32
    return %c0_i32, %c0_i32_0 : i32, i32
  }
  func.func @transform_2(%arg0: i32) -> (i32, i32) {
    %c0_i32 = arith.constant 0 : i32
    %c0_i32_0 = arith.constant 0 : i32
    %c0_i32_1 = arith.constant 0 : i32
    return %c0_i32, %c0_i32_0 : i32, i32
  }
  func.func @transform_3(%arg0: i32) -> (i32, i32) {
    %c0_i32 = arith.constant 0 : i32
    %c0_i32_0 = arith.constant 0 : i32
    %c0_i32_1 = arith.constant 0 : i32
    return %c0_i32, %c0_i32_0 : i32, i32
  }
  func.func @transform_4(%arg0: i32) -> (i32, i32) {
    %c0_i32 = arith.constant 0 : i32
    %c0_i32_0 = arith.constant 0 : i32
    %c0_i32_1 = arith.constant 0 : i32
    return %c0_i32, %c0_i32_0 : i32, i32
  }
  func.func @transform_5(%arg0: i32) -> (i32, i32) {
    %c0_i32 = arith.constant 0 : i32
    %c0_i32_0 = arith.constant 0 : i32
    %c0_i32_1 = arith.constant 0 : i32
    return %c0_i32, %c0_i32_0 : i32, i32
  }
  func.func @transform_6(%arg0: i32) -> (i32, i32) {
    %c0_i32 = arith.constant 0 : i32
    %c0_i32_0 = arith.constant 0 : i32
    %c0_i32_1 = arith.constant 0 : i32
    return %c0_i32, %c0_i32_0 : i32, i32
  }
  func.func @transform_7(%arg0: i32) -> (i32, i32) {
    %c0_i32 = arith.constant 0 : i32
    %c0_i32_0 = arith.constant 0 : i32
    return %arg0, %c0_i32 : i32, i32
  }
}

</mosaic_0001>

<llo_original>
// kernel: tpu_custom_call.1
$region0: #{tpu_custom_call.1}
  #allocation0 [shape = 'u32[]', space=smem, size = 0x4, offset = 0x4, fixed_abs, tag = 'smem constant byte address 0x4 - core index']
  #allocation1 [shape = 'u32[144,128]{1,0:T(1,128)}', space=vmem, size = 0x12000, scoped, tag = 'internal scratch']
  %s0 = inlined_call_operand.vmem [shape: f32[32,16], index: 0, kind: input, shape index: {}]
  %s1 = inlined_call_operand.hbm [shape: bf16[16,128], index: 1, kind: input, shape index: {}]
  %s2 = inlined_call_operand.vmem [shape: f32[1,128], index: 2, kind: input, shape index: {}]
  %s3 = inlined_call_operand.hbm [shape: bf16[128,128], index: 3, kind: input, shape index: {}]
  %s4 = inlined_call_operand.vmem [shape: f32[1,128], index: 4, kind: input, shape index: {}]
  %s5 = inlined_call_operand.vmem [shape: bf16[128,128], index: 5, kind: input, shape index: {}]
  %s6 = inlined_call_operand.vmem [shape: f32[1,128], index: 6, kind: input, shape index: {}]
  %s7 = inlined_call_operand.hbm [shape: f32[32,128], index: 7, kind: output, shape index: {}]
  %s8 = sld [smem:[#allocation0]]
  $region69: #{tpu_custom_call.1} parent=0
    _
  %s10 = ssub.s32 1, %s8
  %s11 = scalar_select 0, %s10, %s8
  $region1: #{tpu_custom_call.1} parent=0
    #allocation2 [shape = 'u8[4096]{0}', space=vmem, size = 0x1000, scoped, tag = 'input window, operand 1, single buffered']
    #allocation3 [shape = 's32[2]{0}', space=sflag, size = 0x8, scoped, tag = 'scoped memory for tpu_custom_call.1']
    #allocation4 [shape = 's32[2]{0}', space=sflag, size = 0x8, scoped, tag = 'scoped memory for tpu_custom_call.1']
    #allocation5 [shape = 'u8[32768]{0}', space=vmem, size = 0x8000, scoped, tag = 'input window, operand 3, single buffered']
    #allocation6 [shape = 's32[1]{0}', space=sflag, size = 0x4, scoped, tag = 'scoped memory for tpu_custom_call.1']
    #allocation7 [shape = 'u8[8192]{0}', space=vmem, size = 0x2000, scoped, tag = 'output window, operand 0']
    %12 = vsyncpa [#allocation3], 0
    %13 = vsyncpa [#allocation6], 0
    %14 = vsyncpa [#allocation4], 0
    %s15 = scalar_lea.sflag [#allocation4], 1
    %16 = vsyncpa %s15, 0
    loop: start=0, step=1, limit=6
    $region2: #{tpu_custom_call.1} parent=1 // loop_pre_header
      _
    $region3: #{tpu_custom_call.1} parent=1 // loop_header
      %s18 = sphi 0, %s22
      %p19 = scmp.ge.s32.totalorder %s18, 6
      %s28 = sphi 0, %s30
      %s31 = sphi 0, %s28
      %s32 = sphi 0, %s31
      %s48 = sphi 0, %s32
      %s52 = sphi 0, %s52
      %s54 = sphi 0, %s52
      %s55 = sphi 0, %s54
      %s69 = sphi 0, %s55
      %s73 = sphi 0, %s73
      %s75 = sphi 0, %s73
      %s76 = sphi 0, %s75
      %s90 = sphi 0, %s76
      %s94 = sphi 0, %s94
      %s96 = sphi 0, %s94
      %s97 = sphi 0, %s96
      %s111 = sphi 0, %s97
      %s115 = sphi 0, %s115
      %s117 = sphi 0, %s115
      %s118 = sphi 0, %s117
      %s132 = sphi 0, %s118
      %s136 = sphi 0, %s136
      %s138 = sphi 0, %s136
      %s139 = sphi 0, %s138
      %s153 = sphi 0, %s139
      %s157 = sphi 0, %s157
      %s159 = sphi 0, %s157
      %s160 = sphi 0, %s159
      %s174 = sphi 0, %s160
      %s180 = sphi 0, %s182
      %s183 = sphi 0, %s180
      %s184 = sphi 0, %s183
      %s200 = sphi 0, %s184
    $region4: #{tpu_custom_call.1} parent=1 // loop_header_branch
      %21 = sbr.rel (%p19) target = $region8
    $region5: #{tpu_custom_call.1} parent=1 // loop_body
      %s23 = ssub.s32 %s18, 1
      %s24 = ssub.s32 %s18, 2
      %s25 = sadd.s32 %s18, 1
      %s26 = ssub.s32 %s18, %s25
      %p27 = scmp.eq.s32.totalorder %s26, 0
      %s29 = sadd.s32 %s28, 1
      %s30 = scalar_select %p27, %s28, %s29
      %p33 = pneg %p27
      %p34 = scmp.eq.s32.totalorder %s18, 3
      %p35 = por %p33, %p34
      %p36 = scmp.ne.s32.totalorder %s28, %s31
      %p37 = scmp.eq.s32.totalorder %s18, 0
      %p38 = por %p36, %p37
      %p39 = scmp.ne.s32.totalorder %s28, %s31
      %p40 = scmp.eq.s32.totalorder %s23, 3
      %p41 = por %p39, %p40
      %p42 = scmp.ne.s32.totalorder %s31, %s32
      %p43 = scmp.eq.s32.totalorder %s23, 0
      %p44 = por %p42, %p43
      %p45 = scmp.ne.s32.totalorder %s31, %s32
      %p46 = scmp.eq.s32.totalorder %s24, 3
      %p47 = por %p45, %p46
      %p49 = scmp.ne.s32.totalorder %s32, %s48
      %p50 = scmp.eq.s32.totalorder %s24, 0
      %p51 = por %p49, %p50
      %s53 = sadd.s32 %s52, 1
      %p56 = scmp.eq.s32.totalorder %s18, 3
      %p57 = scmp.ne.s32.totalorder %s52, %s54
      %p58 = scmp.eq.s32.totalorder %s18, 0
      %p59 = por %p57, %p58
      %p60 = scmp.ne.s32.totalorder %s52, %s54
      %p61 = scmp.eq.s32.totalorder %s23, 3
      %p62 = por %p60, %p61
      %p63 = scmp.ne.s32.totalorder %s54, %s55
      %p64 = scmp.eq.s32.totalorder %s23, 0
      %p65 = por %p63, %p64
      %p66 = scmp.ne.s32.totalorder %s54, %s55
      %p67 = scmp.eq.s32.totalorder %s24, 3
      %p68 = por %p66, %p67
      %p70 = scmp.ne.s32.totalorder %s55, %s69
      %p71 = scmp.eq.s32.totalorder %s24, 0
      %p72 = por %p70, %p71
      %s74 = sadd.s32 %s73, 1
      %p77 = scmp.eq.s32.totalorder %s18, 3
      %p78 = scmp.ne.s32.totalorder %s73, %s75
      %p79 = scmp.eq.s32.totalorder %s18, 0
      %p80 = por %p78, %p79
      %p81 = scmp.ne.s32.totalorder %s73, %s75
      %p82 = scmp.eq.s32.totalorder %s23, 3
      %p83 = por %p81, %p82
      %p84 = scmp.ne.s32.totalorder %s75, %s76
      %p85 = scmp.eq.s32.totalorder %s23, 0
      %p86 = por %p84, %p85
      %p87 = scmp.ne.s32.totalorder %s75, %s76
      %p88 = scmp.eq.s32.totalorder %s24, 3
      %p89 = por %p87, %p88
      %p91 = scmp.ne.s32.totalorder %s76, %s90
      %p92 = scmp.eq.s32.totalorder %s24, 0
      %p93 = por %p91, %p92
      %s95 = sadd.s32 %s94, 1
      %p98 = scmp.eq.s32.totalorder %s18, 3
      %p99 = scmp.ne.s32.totalorder %s94, %s96
      %p100 = scmp.eq.s32.totalorder %s18, 0
      %p101 = por %p99, %p100
      %p102 = scmp.ne.s32.totalorder %s94, %s96
      %p103 = scmp.eq.s32.totalorder %s23, 3
      %p104 = por %p102, %p103
      %p105 = scmp.ne.s32.totalorder %s96, %s97
      %p106 = scmp.eq.s32.totalorder %s23, 0
      %p107 = por %p105, %p106
      %p108 = scmp.ne.s32.totalorder %s96, %s97
      %p109 = scmp.eq.s32.totalorder %s24, 3
      %p110 = por %p108, %p109
      %p112 = scmp.ne.s32.totalorder %s97, %s111
      %p113 = scmp.eq.s32.totalorder %s24, 0
      %p114 = por %p112, %p113
      %s116 = sadd.s32 %s115, 1
      %p119 = scmp.eq.s32.totalorder %s18, 3
      %p120 = scmp.ne.s32.totalorder %s115, %s117
      %p121 = scmp.eq.s32.totalorder %s18, 0
      %p122 = por %p120, %p121
      %p123 = scmp.ne.s32.totalorder %s115, %s117
      %p124 = scmp.eq.s32.totalorder %s23, 3
      %p125 = por %p123, %p124
      %p126 = scmp.ne.s32.totalorder %s117, %s118
      %p127 = scmp.eq.s32.totalorder %s23, 0
      %p128 = por %p126, %p127
      %p129 = scmp.ne.s32.totalorder %s117, %s118
      %p130 = scmp.eq.s32.totalorder %s24, 3
      %p131 = por %p129, %p130
      %p133 = scmp.ne.s32.totalorder %s118, %s132
      %p134 = scmp.eq.s32.totalorder %s24, 0
      %p135 = por %p133, %p134
      %s137 = sadd.s32 %s136, 1
      %p140 = scmp.eq.s32.totalorder %s18, 3
      %p141 = scmp.ne.s32.totalorder %s136, %s138
      %p142 = scmp.eq.s32.totalorder %s18, 0
      %p143 = por %p141, %p142
      %p144 = scmp.ne.s32.totalorder %s136, %s138
      %p145 = scmp.eq.s32.totalorder %s23, 3
      %p146 = por %p144, %p145
      %p147 = scmp.ne.s32.totalorder %s138, %s139
      %p148 = scmp.eq.s32.totalorder %s23, 0
      %p149 = por %p147, %p148
      %p150 = scmp.ne.s32.totalorder %s138, %s139
      %p151 = scmp.eq.s32.totalorder %s24, 3
      %p152 = por %p150, %p151
      %p154 = scmp.ne.s32.totalorder %s139, %s153
      %p155 = scmp.eq.s32.totalorder %s24, 0
      %p156 = por %p154, %p155
      %s158 = sadd.s32 %s157, 1
      %p161 = scmp.eq.s32.totalorder %s18, 3
      %p162 = scmp.ne.s32.totalorder %s157, %s159
      %p163 = scmp.eq.s32.totalorder %s18, 0
      %p164 = por %p162, %p163
      %p165 = scmp.ne.s32.totalorder %s157, %s159
      %p166 = scmp.eq.s32.totalorder %s23, 3
      %p167 = por %p165, %p166
      %p168 = scmp.ne.s32.totalorder %s159, %s160
      %p169 = scmp.eq.s32.totalorder %s23, 0
      %p170 = por %p168, %p169
      %p171 = scmp.ne.s32.totalorder %s159, %s160
      %p172 = scmp.eq.s32.totalorder %s24, 3
      %p173 = por %p171, %p172
      %p175 = scmp.ne.s32.totalorder %s160, %s174
      %p176 = scmp.eq.s32.totalorder %s24, 0
      %p177 = por %p175, %p176
      %s178 = ssub.s32 %s18, %s25
      %p179 = scmp.eq.s32.totalorder %s178, 0
      %s181 = sadd.s32 %s180, 1
      %s182 = scalar_select %p179, %s180, %s181
      %p185 = pneg %p179
      %p186 = scmp.eq.s32.totalorder %s18, 3
      %p187 = por %p185, %p186
      %p188 = scmp.ne.s32.totalorder %s180, %s183
      %p189 = scmp.eq.s32.totalorder %s18, 0
      %p190 = por %p188, %p189
      %p191 = scmp.ne.s32.totalorder %s180, %s183
      %p192 = scmp.eq.s32.totalorder %s23, 3
      %p193 = por %p191, %p192
      %p194 = scmp.ne.s32.totalorder %s183, %s184
      %p195 = scmp.eq.s32.totalorder %s23, 0
      %p196 = por %p194, %p195
      %p197 = scmp.ne.s32.totalorder %s183, %s184
      %p198 = scmp.eq.s32.totalorder %s24, 3
      %p199 = por %p197, %p198
      %p201 = scmp.ne.s32.totalorder %s184, %s200
      %p202 = scmp.eq.s32.totalorder %s24, 0
      %p203 = por %p201, %p202
      %p204 = scmp.le.s32.totalorder 1, %s18
      %p205 = scmp.lt.s32.totalorder %s18, 5
      %p206 = pnand %p204, %p205
      %p207 = pneg %p206
      // Predicated region
      $region9: #{tpu_custom_call.1} parent=5 // pred_check
        _
      $region10: #{tpu_custom_call.1} parent=5 // pred_check_branch
        %209 = sbr.rel (%p206) target = $region12
      $region11: #{tpu_custom_call.1} parent=5 // pred_region
        %s210 = ssub.s32 %s18, 1
        // Predicated region
        $region13: #{tpu_custom_call.1} parent=11 // pred_check
          %p211 = pneg %p65
        $region14: #{tpu_custom_call.1} parent=11 // pred_check_branch
          %213 = sbr.rel (%p211) target = $region16
        $region15: #{tpu_custom_call.1} parent=11 // pred_region
          %s215 = ssub.s32 128, 128
          %216 = vsyncadd [#allocation3], %s215
          %s217 = sshll.u32 [#allocation2], 4
          %s218 = int_to_ptr.vmem [resolvable:$true] %s217
          %223 = dma.hbm_to_vmem [thread:$0]  %s1, 128, %s218, [#allocation3], 64, 64, 4
        $region16: #{tpu_custom_call.1} parent=11 // pred_fallthru
          _
        // Predicated region
        $region17: #{tpu_custom_call.1} parent=11 // pred_check
          %p224 = pneg %p86
        $region18: #{tpu_custom_call.1} parent=11 // pred_check_branch
          %226 = sbr.rel (%p224) target = $region20
        $region19: #{tpu_custom_call.1} parent=11 // pred_region
          _
        $region20: #{tpu_custom_call.1} parent=11 // pred_fallthru
          _
        // Predicated region
        $region21: #{tpu_custom_call.1} parent=11 // pred_check
          %p227 = pneg %p107
        $region22: #{tpu_custom_call.1} parent=11 // pred_check_branch
          %229 = sbr.rel (%p227) target = $region24
        $region23: #{tpu_custom_call.1} parent=11 // pred_region
          %s231 = ssub.s32 1024, 1024
          %232 = vsyncadd [#allocation6], %s231
          %s233 = sshll.u32 [#allocation5], 4
          %s234 = int_to_ptr.vmem [resolvable:$true] %s233
          %239 = dma.hbm_to_vmem [thread:$0]  %s3, 1024, %s234, [#allocation6], 64, 64, 4
        $region24: #{tpu_custom_call.1} parent=11 // pred_fallthru
          _
        // Predicated region
        $region25: #{tpu_custom_call.1} parent=11 // pred_check
          %p240 = pneg %p128
        $region26: #{tpu_custom_call.1} parent=11 // pred_check_branch
          %242 = sbr.rel (%p240) target = $region28
        $region27: #{tpu_custom_call.1} parent=11 // pred_region
          _
        $region28: #{tpu_custom_call.1} parent=11 // pred_fallthru
          _
        // Predicated region
        $region29: #{tpu_custom_call.1} parent=11 // pred_check
          %p243 = pneg %p149
        $region30: #{tpu_custom_call.1} parent=11 // pred_check_branch
          %245 = sbr.rel (%p243) target = $region32
        $region31: #{tpu_custom_call.1} parent=11 // pred_region
          _
        $region32: #{tpu_custom_call.1} parent=11 // pred_fallthru
          _
        // Predicated region
        $region33: #{tpu_custom_call.1} parent=11 // pred_check
          %p246 = pneg %p170
        $region34: #{tpu_custom_call.1} parent=11 // pred_check_branch
          %248 = sbr.rel (%p246) target = $region36
        $region35: #{tpu_custom_call.1} parent=11 // pred_region
          _
        $region36: #{tpu_custom_call.1} parent=11 // pred_fallthru
          _
      $region12: #{tpu_custom_call.1} parent=5 // pred_fallthru
        _
      %p249 = scmp.lt.s32.totalorder %s18, 4
      // Predicated region
      $region37: #{tpu_custom_call.1} parent=5 // pred_check
        %p250 = pneg %p249
      $region38: #{tpu_custom_call.1} parent=5 // pred_check_branch
        %252 = sbr.rel (%p250) target = $region40
      $region39: #{tpu_custom_call.1} parent=5 // pred_region
        // Predicated region
        $region41: #{tpu_custom_call.1} parent=39 // pred_check
          %p253 = pneg %p38
        $region42: #{tpu_custom_call.1} parent=39 // pred_check_branch
          %255 = sbr.rel (%p253) target = $region44
        $region43: #{tpu_custom_call.1} parent=39 // pred_region
          %p256 = scmp.lt.s32.totalorder %s18, 3
          %s257 = scalar_select %p256, %s18, 3
          %s258 = smul.addr %s257, 8
          %s259 = scalar_lea.vmem %s0, %s258
        $region44: #{tpu_custom_call.1} parent=39 // pred_fallthru
          _
      $region40: #{tpu_custom_call.1} parent=5 // pred_fallthru
        _
      %p260 = scmp.le.s32.totalorder 1, %s18
      %p261 = scmp.lt.s32.totalorder %s18, 5
      %p262 = pnand %p260, %p261
      %p263 = pneg %p262
      // Predicated region
      $region45: #{tpu_custom_call.1} parent=5 // pred_check
        _
      $region46: #{tpu_custom_call.1} parent=5 // pred_check_branch
        %265 = sbr.rel (%p262) target = $region48
      $region47: #{tpu_custom_call.1} parent=5 // pred_region
        %s266 = ssub.s32 %s18, 1
        // Predicated region
        $region49: #{tpu_custom_call.1} parent=47 // pred_check
          %p267 = pneg %p65
        $region50: #{tpu_custom_call.1} parent=47 // pred_check_branch
          %269 = sbr.rel (%p267) target = $region52
        $region51: #{tpu_custom_call.1} parent=47 // pred_region
          %270 = dma.done [#allocation3], 128
        $region52: #{tpu_custom_call.1} parent=47 // pred_fallthru
          _
        // Predicated region
        $region53: #{tpu_custom_call.1} parent=47 // pred_check
          %p271 = pneg %p107
        $region54: #{tpu_custom_call.1} parent=47 // pred_check_branch
          %273 = sbr.rel (%p271) target = $region56
        $region55: #{tpu_custom_call.1} parent=47 // pred_region
          %274 = dma.done [#allocation6], 1024
        $region56: #{tpu_custom_call.1} parent=47 // pred_fallthru
          _
        %p275 = scmp.lt.s32.totalorder %s23, 3
        %s276 = scalar_select %p275, %s23, 3
        %s277 = smul.addr %s276, 8
        %s278 = scalar_lea.vmem %s0, %s277
        %p279 = pneg %p44
        %p280 = pneg %p41
        %p281 = pneg %p65
        %p282 = pneg %p62
        %p283 = pneg %p86
        %p284 = pneg %p83
        %p285 = pneg %p107
        %p286 = pneg %p104
        %p287 = pneg %p128
        %p288 = pneg %p125
        %p289 = pneg %p149
        %p290 = pneg %p146
        %p291 = pneg %p170
        %p292 = pneg %p167
        %p293 = pneg %p196
        %p294 = pneg %p193
        %s295 = sand.u32 %s183, 1
        %s296 = scalar_lea.sflag [#allocation4], %s295
        %s297 = sand.u32 %s183, 1
        %s298 = smul.addr %s297, 8
        %s299 = scalar_lea.vmem [#allocation7], %s298
        %p300 = scmp.lt.s32.totalorder %s23, 3
        %s301 = scalar_select %p300, %s23, 3
        %s302 = smul.addr %s301, 8
        %s303 = scalar_lea.vmem %s0, %s302
        %v305 = vld [vmem:[%s303] sm:$0xff]
        %v306 = vpack.c.bf16 %v305, %v305
        %v307 = vld [vmem:[#allocation2] sm:$0xf]
        %v308 = vld [vmem:[#allocation2 + $0x4] sm:$0xf]
        %v309 = vld [vmem:[%s2] sm:$0x1]
        %v311 = vlaneseq
        %v312 = vshrl.u32 %v311, 7
        %v313 = vsub.s32 0, %v312
        %v314 = vrot.slane %v309, %v313
        %v318 = vunpack.c.l.b16 %v307
        %v319 = vunpack.c.l.b16 %v308
        %v320 = vpack.c.b16 %v319, %v318
        %vm322 = vcmask 130048
        %v324 = vsel %vm322, %v306, 0
        %326 = vmatprep.subr.bf16.mxu0 0
        %327 = vmatpush1.bf16.msra.mxu0 %v320
        %328 = vmatprep.subr.bf16.mxu0 0
        %329 = vmatpush1.bf16.msra.mxu0 0
        %330 = vmatprep.subr.bf16.mxu0 0
        %331 = vmatpush1.bf16.msra.mxu0 0
        %332 = vmatprep.subr.bf16.mxu0 0
        %333 = vmatpush1.bf16.msra.mxu0 0
        %334 = vmatprep.subr.bf16.mxu0 0
        %335 = vmatpush1.bf16.msra.mxu0 0
        %336 = vmatprep.subr.bf16.mxu0 0
        %337 = vmatpush1.bf16.msra.mxu0 0
        %338 = vmatprep.subr.bf16.mxu0 0
        %339 = vmatpush1.bf16.msra.mxu0 0
        %340 = vmatprep.subr.bf16.mxu0 0
        %341 = vmatpush1.bf16.msra.mxu0 0
        %342 = vmatprep.subr.bf16.mxu0 0
        %343 = vmatpush1.bf16.msra.mxu0 0
        %344 = vmatprep.subr.bf16.mxu0 0
        %345 = vmatpush1.bf16.msra.mxu0 0
        %346 = vmatprep.subr.bf16.mxu0 0
        %347 = vmatpush1.bf16.msra.mxu0 0
        %348 = vmatprep.subr.bf16.mxu0 0
        %349 = vmatpush1.bf16.msra.mxu0 0
        %350 = vmatprep.subr.bf16.mxu0 0
        %351 = vmatpush1.bf16.msra.mxu0 0
        %352 = vmatprep.subr.bf16.mxu0 0
        %353 = vmatpush1.bf16.msra.mxu0 0
        %354 = vmatprep.subr.bf16.mxu0 0
        %355 = vmatpush1.bf16.msra.mxu0 0
        %356 = vmatprep.subr.bf16.mxu0 0
        %357 = vmatpush1.bf16.msra.mxu0 0
        %358 = vmatprep.mubr.bf16.mxu0 0
        %359 = vmatmul.mubr.bf16.gmra.mrb[0].mxu0 %v324
        %v360 = vpop.f32.mrb[0].mxu0
        %v361 = vadd.f32 %v314, %v360
        %v362 = vpop.f32.mrb[0].mxu0
        %v363 = vpop.f32.mrb[0].mxu0
        %v364 = vpop.f32.mrb[0].mxu0
        %365 = vdwg.mxu0
        %v366 = vmax.f32 %v361, 0.0
        %v367 = vpack.c.bf16 %v366, %v366
        %v368 = vld [vmem:[#allocation5] sm:$0xf]
        %v369 = vld [vmem:[#allocation5 + $0x4] sm:$0xf]
        %v370 = vld [vmem:[#allocation5 + $0x8] sm:$0xf]
        %v371 = vld [vmem:[#allocation5 + $0xc] sm:$0xf]
        %v372 = vld [vmem:[#allocation5 + $0x10] sm:$0xf]
        %v373 = vld [vmem:[#allocation5 + $0x14] sm:$0xf]
        %v374 = vld [vmem:[#allocation5 + $0x18] sm:$0xf]
        %v375 = vld [vmem:[#allocation5 + $0x1c] sm:$0xf]
        %v376 = vld [vmem:[#allocation5 + $0x20] sm:$0xf]
        %v377 = vld [vmem:[#allocation5 + $0x24] sm:$0xf]
        %v378 = vld [vmem:[#allocation5 + $0x28] sm:$0xf]
        %v379 = vld [vmem:[#allocation5 + $0x2c] sm:$0xf]
        %v380 = vld [vmem:[#allocation5 + $0x30] sm:$0xf]
        %v381 = vld [vmem:[#allocation5 + $0x34] sm:$0xf]
        %v382 = vld [vmem:[#allocation5 + $0x38] sm:$0xf]
        %v383 = vld [vmem:[#allocation5 + $0x3c] sm:$0xf]
        %v384 = vld [vmem:[%s4] sm:$0x1]
        %v386 = vlaneseq
        %v387 = vshrl.u32 %v386, 7
        %v388 = vsub.s32 0, %v387
        %v389 = vrot.slane %v384, %v388
        %v407 = vunpack.c.l.b16 %v368
        %v408 = vunpack.c.l.b16 %v369
        %v409 = vunpack.c.l.b16 %v370
        %v410 = vunpack.c.l.b16 %v371
        %v411 = vunpack.c.l.b16 %v372
        %v412 = vunpack.c.l.b16 %v373
        %v413 = vunpack.c.l.b16 %v374
        %v414 = vunpack.c.l.b16 %v375
        %v415 = vunpack.c.l.b16 %v376
        %v416 = vunpack.c.l.b16 %v377
        %v417 = vunpack.c.l.b16 %v378
        %v418 = vunpack.c.l.b16 %v379
        %v419 = vunpack.c.l.b16 %v380
        %v420 = vunpack.c.l.b16 %v381
        %v421 = vunpack.c.l.b16 %v382
        %v422 = vunpack.c.l.b16 %v383
        %v423 = vpack.c.b16 %v408, %v407
        %v424 = vpack.c.b16 %v410, %v409
        %v425 = vpack.c.b16 %v412, %v411
        %v426 = vpack.c.b16 %v414, %v413
        %v427 = vpack.c.b16 %v416, %v415
        %v428 = vpack.c.b16 %v418, %v417
        %v429 = vpack.c.b16 %v420, %v419
        %v430 = vpack.c.b16 %v422, %v421
        %439 = vmatprep.subr.bf16.mxu0 0
        %440 = vmatpush1.bf16.msra.mxu0 %v423
        %441 = vmatprep.subr.bf16.mxu0 0
        %442 = vmatpush1.bf16.msra.mxu0 %v424
        %443 = vmatprep.subr.bf16.mxu0 0
        %444 = vmatpush1.bf16.msra.mxu0 %v425
        %445 = vmatprep.subr.bf16.mxu0 0
        %446 = vmatpush1.bf16.msra.mxu0 %v426
        %447 = vmatprep.subr.bf16.mxu0 0
        %448 = vmatpush1.bf16.msra.mxu0 %v427
        %449 = vmatprep.subr.bf16.mxu0 0
        %450 = vmatpush1.bf16.msra.mxu0 %v428
        %451 = vmatprep.subr.bf16.mxu0 0
        %452 = vmatpush1.bf16.msra.mxu0 %v429
        %453 = vmatprep.subr.bf16.mxu0 0
        %454 = vmatpush1.bf16.msra.mxu0 %v430
        %455 = vmatprep.subr.bf16.mxu0 0
        %456 = vmatpush1.bf16.msra.mxu0 0
        %457 = vmatprep.subr.bf16.mxu0 0
        %458 = vmatpush1.bf16.msra.mxu0 0
        %459 = vmatprep.subr.bf16.mxu0 0
        %460 = vmatpush1.bf16.msra.mxu0 0
        %461 = vmatprep.subr.bf16.mxu0 0
        %462 = vmatpush1.bf16.msra.mxu0 0
        %463 = vmatprep.subr.bf16.mxu0 0
        %464 = vmatpush1.bf16.msra.mxu0 0
        %465 = vmatprep.subr.bf16.mxu0 0
        %466 = vmatpush1.bf16.msra.mxu0 0
        %467 = vmatprep.subr.bf16.mxu0 0
        %468 = vmatpush1.bf16.msra.mxu0 0
        %469 = vmatprep.subr.bf16.mxu0 0
        %470 = vmatpush1.bf16.msra.mxu0 0
        %471 = vmatprep.mubr.bf16.mxu0 0
        %472 = vmatmul.mubr.bf16.gmra.mrb[0].mxu0 %v367
        %v473 = vpop.f32.mrb[0].mxu0
        %v474 = vadd.f32 %v389, %v473
        %v475 = vpop.f32.mrb[0].mxu0
        %v476 = vpop.f32.mrb[0].mxu0
        %v477 = vpop.f32.mrb[0].mxu0
        %478 = vdwg.mxu0
        %v479 = vmax.f32 %v474, 0.0
        %v480 = vpack.c.bf16 %v479, %v479
        %v481 = vld [vmem:[%s5] sm:$0xf]
        %v482 = vld [vmem:[%s5 + $0x4] sm:$0xf]
        %v483 = vld [vmem:[%s5 + $0x8] sm:$0xf]
        %v484 = vld [vmem:[%s5 + $0xc] sm:$0xf]
        %v485 = vld [vmem:[%s5 + $0x10] sm:$0xf]
        %v486 = vld [vmem:[%s5 + $0x14] sm:$0xf]
        %v487 = vld [vmem:[%s5 + $0x18] sm:$0xf]
        %v488 = vld [vmem:[%s5 + $0x1c] sm:$0xf]
        %v489 = vld [vmem:[%s5 + $0x20] sm:$0xf]
        %v490 = vld [vmem:[%s5 + $0x24] sm:$0xf]
        %v491 = vld [vmem:[%s5 + $0x28] sm:$0xf]
        %v492 = vld [vmem:[%s5 + $0x2c] sm:$0xf]
        %v493 = vld [vmem:[%s5 + $0x30] sm:$0xf]
        %v494 = vld [vmem:[%s5 + $0x34] sm:$0xf]
        %v495 = vld [vmem:[%s5 + $0x38] sm:$0xf]
        %v496 = vld [vmem:[%s5 + $0x3c] sm:$0xf]
        %v497 = vld [vmem:[%s6] sm:$0x1]
        %v499 = vlaneseq
        %v500 = vshrl.u32 %v499, 7
        %v501 = vsub.s32 0, %v500
        %v502 = vrot.slane %v497, %v501
        %v520 = vunpack.c.l.b16 %v481
        %v521 = vunpack.c.l.b16 %v482
        %v522 = vunpack.c.l.b16 %v483
        %v523 = vunpack.c.l.b16 %v484
        %v524 = vunpack.c.l.b16 %v485
        %v525 = vunpack.c.l.b16 %v486
        %v526 = vunpack.c.l.b16 %v487
        %v527 = vunpack.c.l.b16 %v488
        %v528 = vunpack.c.l.b16 %v489
        %v529 = vunpack.c.l.b16 %v490
        %v530 = vunpack.c.l.b16 %v491
        %v531 = vunpack.c.l.b16 %v492
        %v532 = vunpack.c.l.b16 %v493
        %v533 = vunpack.c.l.b16 %v494
        %v534 = vunpack.c.l.b16 %v495
        %v535 = vunpack.c.l.b16 %v496
        %v536 = vpack.c.b16 %v521, %v520
        %v537 = vpack.c.b16 %v523, %v522
        %v538 = vpack.c.b16 %v525, %v524
        %v539 = vpack.c.b16 %v527, %v526
        %v540 = vpack.c.b16 %v529, %v528
        %v541 = vpack.c.b16 %v531, %v530
        %v542 = vpack.c.b16 %v533, %v532
        %v543 = vpack.c.b16 %v535, %v534
        %552 = vmatprep.subr.bf16.mxu0 0
        %553 = vmatpush1.bf16.msra.mxu0 %v536
        %554 = vmatprep.subr.bf16.mxu0 0
        %555 = vmatpush1.bf16.msra.mxu0 %v537
        %556 = vmatprep.subr.bf16.mxu0 0
        %557 = vmatpush1.bf16.msra.mxu0 %v538
        %558 = vmatprep.subr.bf16.mxu0 0
        %559 = vmatpush1.bf16.msra.mxu0 %v539
        %560 = vmatprep.subr.bf16.mxu0 0
        %561 = vmatpush1.bf16.msra.mxu0 %v540
        %562 = vmatprep.subr.bf16.mxu0 0
        %563 = vmatpush1.bf16.msra.mxu0 %v541
        %564 = vmatprep.subr.bf16.mxu0 0
        %565 = vmatpush1.bf16.msra.mxu0 %v542
        %566 = vmatprep.subr.bf16.mxu0 0
        %567 = vmatpush1.bf16.msra.mxu0 %v543
        %568 = vmatprep.subr.bf16.mxu0 0
        %569 = vmatpush1.bf16.msra.mxu0 0
        %570 = vmatprep.subr.bf16.mxu0 0
        %571 = vmatpush1.bf16.msra.mxu0 0
        %572 = vmatprep.subr.bf16.mxu0 0
        %573 = vmatpush1.bf16.msra.mxu0 0
        %574 = vmatprep.subr.bf16.mxu0 0
        %575 = vmatpush1.bf16.msra.mxu0 0
        %576 = vmatprep.subr.bf16.mxu0 0
        %577 = vmatpush1.bf16.msra.mxu0 0
        %578 = vmatprep.subr.bf16.mxu0 0
        %579 = vmatpush1.bf16.msra.mxu0 0
        %580 = vmatprep.subr.bf16.mxu0 0
        %581 = vmatpush1.bf16.msra.mxu0 0
        %582 = vmatprep.subr.bf16.mxu0 0
        %583 = vmatpush1.bf16.msra.mxu0 0
        %584 = vmatprep.mubr.bf16.mxu0 0
        %585 = vmatmul.mubr.bf16.gmra.mrb[0].mxu0 %v480
        %v586 = vpop.f32.mrb[0].mxu0
        %v587 = vadd.f32 %v502, %v586
        %v588 = vpop.f32.mrb[0].mxu0
        %v589 = vpop.f32.mrb[0].mxu0
        %v590 = vpop.f32.mrb[0].mxu0
        %591 = vdwg.mxu0
        %592 = vst [vmem:[%s299] sm:$0xff] %v587
        %s593 = sand.u32 %s183, 1
        %s594 = scalar_lea.sflag [#allocation4], %s593
        %s595 = sand.u32 %s183, 1
        %s596 = smul.addr %s595, 8
        %s597 = scalar_lea.vmem [#allocation7], %s596
        // Predicated region
        $region57: #{tpu_custom_call.1} parent=47 // pred_check
          %p598 = pneg %p193
        $region58: #{tpu_custom_call.1} parent=47 // pred_check_branch
          %600 = sbr.rel (%p598) target = $region60
        $region59: #{tpu_custom_call.1} parent=47 // pred_region
          %s602 = ssub.s32 128, 128
          %603 = vsyncadd %s594, %s602
          %s604 = smul.addr %s23, 128
          %s605 = scalar_lea.hbm %s7, %s604
          %s607 = sshll.u32 %s597, 4
          %s608 = int_to_ptr.vmem [resolvable:$true] %s607
          %610 = dma.vmem_to_hbm [thread:$0]  %s608, 128, %s605, %s594
        $region60: #{tpu_custom_call.1} parent=47 // pred_fallthru
          _
      $region48: #{tpu_custom_call.1} parent=5 // pred_fallthru
        _
      %p611 = scmp.le.s32.totalorder 2, %s18
      // Predicated region
      $region61: #{tpu_custom_call.1} parent=5 // pred_check
        %p612 = pneg %p611
      $region62: #{tpu_custom_call.1} parent=5 // pred_check_branch
        %614 = sbr.rel (%p612) target = $region64
      $region63: #{tpu_custom_call.1} parent=5 // pred_region
        %s615 = ssub.s32 %s18, 2
        // Predicated region
        $region65: #{tpu_custom_call.1} parent=63 // pred_check
          %p616 = pneg %p199
        $region66: #{tpu_custom_call.1} parent=63 // pred_check_branch
          %618 = sbr.rel (%p616) target = $region68
        $region67: #{tpu_custom_call.1} parent=63 // pred_region
          %s619 = sand.u32 %s184, 1
          %s620 = scalar_lea.sflag [#allocation4], %s619
          %s621 = sand.u32 %s184, 1
          %s622 = smul.addr %s621, 8
          %s623 = scalar_lea.vmem [#allocation7], %s622
          %624 = dma.done %s620, 128
        $region68: #{tpu_custom_call.1} parent=63 // pred_fallthru
          _
      $region64: #{tpu_custom_call.1} parent=5 // pred_fallthru
        _
    $region6: #{tpu_custom_call.1} parent=1 // loop_footer
      %s22 = sadd.s32 1, %s18
    $region7: #{tpu_custom_call.1} parent=1 // loop_footer_branch
      %17 = sbr.rel target = $region3
    $region8: #{tpu_custom_call.1} parent=1 // loop_exit
      _
    %625 = vsyncpa [#allocation3], 1
    %s626 = scalar_lea.sflag [#allocation3], 1
    %627 = vsyncpa %s626, 1
    %628 = vsyncpa [#allocation6], 1
    %629 = vsyncpa [#allocation4], 1
    %s630 = scalar_lea.sflag [#allocation4], 1
    %631 = vsyncpa %s630, 1

</llo_original>
